<compile_context>
chip_gen: v5e
topology: v5e:2x2
jax: 0.10.0
libtpu: 0.0.40
codegen_flags: <defaults>
</compile_context>

<pallas_src>
import functools

import jax
import jax.numpy as jnp
from jax.experimental import pallas as pl
from jax.experimental.pallas import tpu as pltpu


_EPS = 1e-6
_BLOCK_BYTES = 8 * 1024 * 1024   # ~8 MiB input block; 2x buffers << 32 MiB scoped VMEM
_MAX_BLOCK_LANES = 4096          # bounds the unrolled chunk loop (<= 32 chunks)
_MAX_BLOCK_ROWS = 4096           # bounds the (TR, 128) f32 accumulator (<= 2 MiB)


def _round_up(x: int, m: int) -> int:
    return (x + m - 1) // m * m


def _entropy_cm_kernel(p_ref, o_ref, acc_ref, *,
                       inv_spatial, block_rows, block_lanes, lane_steps,
                       num_lane_chunks, total_rows, total_lanes,
                       needs_lane_mask, needs_row_mask, emit_row_sums):
    s = pl.program_id(0)
    r = pl.program_id(1)
    l = pl.program_id(2)

    @pl.when(l == 0)
    def _():
        acc_ref[...] = jnp.zeros_like(acc_ref)

    # First flattened-spatial column covered by this block.
    lane_start = (s * lane_steps + l) * block_lanes

    def accumulate(mask_lanes):
        # Ref-sliced 128-lane chunk adds: 1 vld + 1 vadd per vreg, in-kernel
        # upcast to f32 (keeps bf16/fp8 inputs at native HBM byte width).
        partial = acc_ref[...]
        for k in range(num_lane_chunks):
            chunk = p_ref[:, k * 128:(k + 1) * 128].astype(jnp.float32)
            if mask_lanes:
                lane_ids = lane_start + k * 128 + jax.lax.broadcasted_iota(
                    jnp.int32, chunk.shape, 1)
                chunk = jnp.where(lane_ids < total_lanes, chunk, 0.0)
            partial = partial + chunk
        acc_ref[...] = partial

    if needs_lane_mask:
        # Only the single edge block can hold out-of-range lanes; every other
        # block takes the cheap unmasked path.
        @pl.when(lane_start + block_lanes <= total_lanes)
        def _():
            accumulate(False)

        @pl.when(lane_start + block_lanes > total_lanes)
        def _():
            accumulate(True)
    else:
        accumulate(False)

    @pl.when(l == pl.num_programs(2) - 1)
    def _():
        if emit_row_sums:
            # Lane-split mode: hand back the raw per-row partial sums; the
            # wrapper combines the halves and applies the entropy.
            o_ref[...] = acc_ref[...].reshape(o_ref.shape)
        else:
            # One cross-lane reduce per row block, then entropy on the mean.
            row_sum = jnp.sum(acc_ref[...], axis=-1, keepdims=True)   # (TR, 1)
            avg_p = row_sum * inv_spatial                             # mean over TRUE H*W
            ent = avg_p * jnp.log(avg_p + _EPS)
            if needs_row_mask:
                row_ids = r * block_rows + jax.lax.broadcasted_iota(
                    jnp.int32, ent.shape, 0)
                ent = jnp.where(row_ids < total_rows, ent, 0.0)
            # Lane-dense store of the per-block scalar partial.
            o_ref[...] = jnp.broadcast_to(jnp.sum(ent), o_ref.shape)


def entropy_class_marginals(probs: jax.Array) -> jax.Array:
    """probs: (N, C, H, W) float -> scalar float32."""
    N, C, H, W = probs.shape
    R, L = N * C, H * W
    itemsize = jnp.dtype(probs.dtype).itemsize
    p2 = probs.reshape(R, L)   # free (contiguous); NO pad, NO dtype cast

    # ---- tile sizing from the byte budget --------------------------------
    TL = min(_round_up(L, 128), _MAX_BLOCK_LANES)             # multiple of 128
    lane_blocks = pl.cdiv(L, TL)
    rows_budget = max(8, (_BLOCK_BYTES // (TL * itemsize)) // 8 * 8)
    TR = min(_round_up(R, 8), rows_budget, _MAX_BLOCK_ROWS)   # multiple of 8
    row_blocks = pl.cdiv(R, TR)

    # v7x megacore: with a single row block, split the lane reduction into two
    # parallel halves so both TensorCores stream HBM (harmless on v5e/v6e).
    split = (row_blocks == 1) and (lane_blocks >= 2) and (lane_blocks % 2 == 0)
    S = 2 if split else 1
    lane_steps = lane_blocks // S

    needs_lane_mask = (L % TL) != 0
    needs_row_mask = (R % TR) != 0

    kernel = functools.partial(
        _entropy_cm_kernel,
        inv_spatial=1.0 / float(L),
        block_rows=TR, block_lanes=TL, lane_steps=lane_steps,
        num_lane_chunks=TL // 128, total_rows=R, total_lanes=L,
        needs_lane_mask=needs_lane_mask, needs_row_mask=needs_row_mask,
        emit_row_sums=split,
    )

    if split:
        out_shape = jax.ShapeDtypeStruct((S, TR, 128), jnp.float32)
        out_spec = pl.BlockSpec((1, TR, 128), lambda s, r, l: (s, 0, 0))
        out_bytes = S * TR * 128 * 4
    else:
        out_shape = jax.ShapeDtypeStruct((row_blocks, 1, 128), jnp.float32)
        out_spec = pl.BlockSpec((1, 1, 128), lambda s, r, l: (r, 0, 0))
        out_bytes = row_blocks * 128 * 4

    partials = pl.pallas_call(
        kernel,
        out_shape=out_shape,
        grid_spec=pltpu.PrefetchScalarGridSpec(
            num_scalar_prefetch=0,
            grid=(S, row_blocks, lane_steps),
            in_specs=[pl.BlockSpec((TR, TL),
                                   lambda s, r, l: (r, s * lane_steps + l))],
            out_specs=out_spec,
            scratch_shapes=[pltpu.VMEM((TR, 128), jnp.float32)],
        ),
        compiler_params=pltpu.CompilerParams(
            dimension_semantics=("parallel", "parallel", "arbitrary"),
            vmem_limit_bytes=32 * 1024 * 1024,   # > v5e's 16 MiB default on purpose
        ),
        cost_estimate=pl.CostEstimate(
            flops=2 * R * L,
            transcendentals=R,
            bytes_accessed=R * L * itemsize + out_bytes,
        ),
    )(p2)

    if split:
        # Combine the two lane halves, then the (tiny) entropy on R rows.
        row_sum = jnp.sum(partials, axis=(0, 2))[:R]            # (R,)
        avg_p = row_sum * (1.0 / float(L))
        ent = avg_p * jnp.log(avg_p + _EPS)
        return jnp.sum(ent) / N
    # Normal path: sum the per-row-block entropy partials, divide by batch.
    return jnp.sum(partials[:, 0, 0]) / N


def _reference(probs):
    avg_p = probs.mean(axis=(2, 3))
    return jnp.mean(jnp.sum(avg_p * jnp.log(avg_p + _EPS), axis=1))


if __name__ == "__main__":
    key = jax.random.PRNGKey(0)
    k0, k1, k2 = jax.random.split(key, 3)

    def check(shape, k):
        logits = jax.random.normal(k, shape, dtype=jnp.float32)
        probs = jax.nn.softmax(logits, axis=1)   # valid class probabilities
        out = jax.block_until_ready(entropy_class_marginals(probs))
        ref = _reference(probs)
        assert jnp.allclose(out, ref, atol=1e-4, rtol=1e-4), (shape, out, ref)

    check((2, 4, 16, 16), k0)     # aligned shapes: single-block, no masking
    check((2, 3, 7, 9), k1)       # ragged rows/lanes: in-kernel edge masking
    check((1, 7, 127, 127), k2)   # single row block: lane-split (2-TC) path
    print("KERNEL_OK")
</pallas_src>

<mosaic_0001>
module attributes {stable_mosaic.version = 11 : i64} {
  func.func @_entropy_cm_kernel(%arg0: i32, %arg1: i32, %arg2: i32, %arg3: memref<8x256xf32, #tpu.memory_space<vmem>>, %arg4: memref<1x1x128xf32, #tpu.memory_space<vmem>>, %arg5: memref<8x128xf32, #tpu.memory_space<vmem>>) attributes {dimension_semantics = [#tpu.dimension_semantics<parallel>, #tpu.dimension_semantics<parallel>, #tpu.dimension_semantics<arbitrary>], iteration_bounds = array<i64: 1, 1, 1>, scalar_prefetch = 0 : i64, scratch_operands = 1 : i64, tpu.core_type = #tpu.core_type<tc>, window_params = [{transform_indices = @transform_0, window_bounds = array<i64: 8, 256>}, {transform_indices = @transform_1, window_bounds = array<i64: 1, 1, 128>}]} {
    %c0_i32 = arith.constant 0 : i32
    %0 = arith.cmpi eq, %arg2, %c0_i32 : i32
    %1 = arith.extui %0 : i1 to i32
    %c0_i32_0 = arith.constant 0 : i32
    %2 = arith.cmpi ne, %1, %c0_i32_0 : i32
    scf.if %2 {
      %cst = arith.constant 0.000000e+00 : f32
      %12 = vector.broadcast %cst : f32 to vector<8x128xf32>
      %c0_9 = arith.constant 0 : index
      %c0_10 = arith.constant 0 : index
      %13 = vector.load %arg5[%c0_9, %c0_10] : memref<8x128xf32, #tpu.memory_space<vmem>>, vector<8x128xf32>
      tpu.vector_store %arg5[%c0_9, %c0_10], %12 {strides = array<i32>} : memref<8x128xf32, #tpu.memory_space<vmem>>, vector<8x128xf32>,
    } else {
    }
    %c0 = arith.constant 0 : index
    %c0_1 = arith.constant 0 : index
    %3 = vector.load %arg5[%c0, %c0_1] : memref<8x128xf32, #tpu.memory_space<vmem>>, vector<8x128xf32>
    %c0_2 = arith.constant 0 : index
    %c0_3 = arith.constant 0 : index
    %4 = vector.load %arg3[%c0_2, %c0_3] : memref<8x256xf32, #tpu.memory_space<vmem>>, vector<8x128xf32>
    %5 = arith.addf %3, %4 : vector<8x128xf32>
    %c0_4 = arith.constant 0 : index
    %c128 = arith.constant 128 : index
    %6 = vector.load %arg3[%c0_4, %c128] : memref<8x256xf32, #tpu.memory_space<vmem>>, vector<8x128xf32>
    %7 = arith.addf %5, %6 : vector<8x128xf32>
    %c0_5 = arith.constant 0 : index
    %c0_6 = arith.constant 0 : index
    %8 = vector.load %arg5[%c0_5, %c0_6] : memref<8x128xf32, #tpu.memory_space<vmem>>, vector<8x128xf32>
    tpu.vector_store %arg5[%c0_5, %c0_6], %7 {strides = array<i32>} : memref<8x128xf32, #tpu.memory_space<vmem>>, vector<8x128xf32>,
    %c0_i32_7 = arith.constant 0 : i32
    %9 = arith.cmpi eq, %arg2, %c0_i32_7 : i32
    %10 = arith.extui %9 : i1 to i32
    %c0_i32_8 = arith.constant 0 : i32
    %11 = arith.cmpi ne, %10, %c0_i32_8 : i32
    scf.if %11 {
      %c0_9 = arith.constant 0 : index
      %c0_10 = arith.constant 0 : index
      %12 = vector.load %arg5[%c0_9, %c0_10] : memref<8x128xf32, #tpu.memory_space<vmem>>, vector<8x128xf32>
      %cst = arith.constant dense<0.000000e+00> : vector<8xf32>
      %13 = vector.multi_reduction <add>, %12, %cst [1] : vector<8x128xf32> to vector<8xf32>
      %14 = vector.shape_cast %13 : vector<8xf32> to vector<8x1xf32>
      %cst_11 = arith.constant 3.906250e-03 : f32
      %15 = vector.broadcast %cst_11 : f32 to vector<8x1xf32>
      %16 = arith.mulf %14, %15 : vector<8x1xf32>
      %cst_12 = arith.constant 9.99999997E-7 : f32
      %17 = vector.broadcast %cst_12 : f32 to vector<8x1xf32>
      %18 = arith.addf %16, %17 : vector<8x1xf32>
      %19 = math.log %18 : vector<8x1xf32>
      %20 = arith.mulf %16, %19 : vector<8x1xf32>
      %21 = vector.shape_cast %20 : vector<8x1xf32> to vector<1x8x1xf32>
      %cst_13 = arith.constant dense<0.000000e+00> : vector<1xf32>
      %22 = vector.multi_reduction <add>, %21, %cst_13 [1, 2] : vector<1x8x1xf32> to vector<1xf32>
      %23 = vector.shape_cast %22 : vector<1xf32> to vector<1x1x1xf32>
      %24 = vector.extract %23[0, 0, 0] : f32 from vector<1x1x1xf32>
      %25 = vector.broadcast %24 : f32 to vector<1x1x128xf32>
      %c0_14 = arith.constant 0 : index
      %c0_15 = arith.constant 0 : index
      %c0_16 = arith.constant 0 : index
      %26 = vector.load %arg4[%c0_14, %c0_15, %c0_16] : memref<1x1x128xf32, #tpu.memory_space<vmem>>, vector<1x1x128xf32>
      tpu.vector_store %arg4[%c0_14, %c0_15, %c0_16], %25 {strides = array<i32>} : memref<1x1x128xf32, #tpu.memory_space<vmem>>, vector<1x1x128xf32>,
    } else {
    }
    return
  }
  func.func @transform_0(%arg0: i32, %arg1: i32, %arg2: i32) -> (i32, i32) {
    %c1_i32 = arith.constant 1 : i32
    %0 = arith.muli %arg0, %c1_i32 : i32
    %1 = arith.addi %0, %arg2 : i32
    %c0_i32 = arith.constant 0 : i32
    return %arg1, %1 : i32, i32
  }
  func.func @transform_1(%arg0: i32, %arg1: i32, %arg2: i32) -> (i32, i32, i32) {
    %c0_i32 = arith.constant 0 : i32
    %c0_i32_0 = arith.constant 0 : i32
    %c0_i32_1 = arith.constant 0 : i32
    return %arg1, %c0_i32, %c0_i32_0 : i32, i32, i32
  }
}

</mosaic_0001>

<llo_original>
// kernel: tpu_custom_call.1
$region0: #{tpu_custom_call.1}
  #allocation0 [shape = 'u32[]', space=smem, size = 0x4, offset = 0x4, fixed_abs, tag = 'smem constant byte address 0x4 - core index']
  #allocation1 [shape = 'u32[72,128]{1,0:T(1,128)}', space=vmem, size = 0x9000, scoped, tag = 'internal scratch']
  #allocation2 [shape = 'f32[8,128]{1,0:T(8,128)}', space=vmem, size = 0x1000, scoped, tag = 'scratch operand']
  %s0 = inlined_call_operand.hbm [shape: f32[8,256], index: 0, kind: input, shape index: {}]
  %s1 = inlined_call_operand.hbm [shape: f32[1,1,128], index: 1, kind: output, shape index: {}]
  %s2 = sld [smem:[#allocation0]]
  $region26: #{tpu_custom_call.1} parent=0
    _
  %s4 = ssub.s32 1, %s2
  %s5 = scalar_select 0, %s4, %s2
  $region1: #{tpu_custom_call.1} parent=0
    #allocation3 [shape = 'u8[8192]{0}', space=vmem, size = 0x2000, scoped, tag = 'input window, operand 0, single buffered']
    #allocation4 [shape = 's32[1]{0}', space=sflag, size = 0x4, scoped, tag = 'scoped memory for tpu_custom_call.1']
    #allocation5 [shape = 's32[1]{0}', space=sflag, size = 0x4, scoped, tag = 'scoped memory for tpu_custom_call.1']
    #allocation6 [shape = 'u8[512]{0}', space=vmem, size = 0x400, scoped, tag = 'output window, operand 0, single buffered']
    %6 = vsyncpa [#allocation4], 0
    %7 = vsyncpa [#allocation5], 0
    // Predicated region
    $region2: #{tpu_custom_call.1} parent=1 // pred_check
      _
    $region3: #{tpu_custom_call.1} parent=1 // pred_check_branch
      %9 = sbr.rel (0) target = $region5
    $region4: #{tpu_custom_call.1} parent=1 // pred_region
      %s10 = sadd.s32 0, 0
      %s11 = smul.u32 2, %s10
      %13 = vsyncadd [#allocation4], 0
      %s14 = smul.addr %s11, 8
      %s15 = scalar_lea.hbm %s0, %s14
      %s17 = sshll.u32 %s15, 4
      %s18 = int_to_ptr.hbm [resolvable:$true] %s17
      %s19 = sshll.u32 [#allocation3], 4
      %s20 = int_to_ptr.vmem [resolvable:$true] %s19
      %22 = dma.hbm_to_vmem [thread:$0]  %s18, 256, %s20, [#allocation4]
    $region5: #{tpu_custom_call.1} parent=1 // pred_fallthru
      _
    // Predicated region
    $region6: #{tpu_custom_call.1} parent=1 // pred_check
      _
    $region7: #{tpu_custom_call.1} parent=1 // pred_check_branch
      %24 = sbr.rel (0) target = $region9
    $region8: #{tpu_custom_call.1} parent=1 // pred_region
      %26 = dma.done [#allocation4], 256
    $region9: #{tpu_custom_call.1} parent=1 // pred_fallthru
      _
    %s27 = sadd.s32 0, 0
    %s28 = smul.u32 2, %s27
    %p29 = scmp.eq.s32.totalorder 0, 0
    // Predicated region
    $region10: #{tpu_custom_call.1} parent=1 // pred_check
      %p30 = pneg %p29
    $region11: #{tpu_custom_call.1} parent=1 // pred_check_branch
      %32 = sbr.rel (%p30) target = $region13
    $region12: #{tpu_custom_call.1} parent=1 // pred_region
      %33 = vst [vmem:[#allocation2] sm:$0xff] 0.0
    $region13: #{tpu_custom_call.1} parent=1 // pred_fallthru
      _
    %v34 = vld [vmem:[#allocation2] sm:$0xff]
    %v35 = vld [vmem:[#allocation3] sm:$0xff]
    %v36 = vadd.f32 %v34, %v35
    %v37 = vld [vmem:[#allocation3 + $0x8] sm:$0xff]
    %v38 = vadd.f32 %v36, %v37
    %39 = vst [vmem:[#allocation2] sm:$0xff] %v38
    // Predicated region
    $region14: #{tpu_custom_call.1} parent=1 // pred_check
      %p40 = pneg %p29
    $region15: #{tpu_custom_call.1} parent=1 // pred_check_branch
      %42 = sbr.rel (%p40) target = $region17
    $region16: #{tpu_custom_call.1} parent=1 // pred_region
      %v43 = vld [vmem:[#allocation2] sm:$0xff]
      %44 = vadd.xlane.f32.xlu0 %v43
      %v45 = vpop.xlane.xlu0 %44
      %v46 = vmul.f32 %v45, 0.00390625
      %v47 = vadd.f32 %v46, 1e-06
      %v48 = vlog2.pop %v47
      %v49 = vmul.f32 %v48, 0.6931472
      %v50 = vmul.f32 %v46, %v49
      %vm51 = vcmask 7168
      %v52 = vsel %vm51, %v50, 0.0
      %53 = vadd.xlane.f32.xlu0 %v52
      %v54 = vpop.xlane.xlu0 %53
      %v55 = vrot.slane %v54, 4
      %v56 = vadd.f32 %v54, %v55
      %v57 = vrot.slane %v56, 2
      %v58 = vadd.f32 %v56, %v57
      %v59 = vrot.slane %v58, 1
      %v60 = vadd.f32 %v58, %v59
      %s61 = vtos %v60
      %v62 = vstv %s61
      %63 = vst [vmem:[#allocation6] sm:$0x1] %v62
    $region17: #{tpu_custom_call.1} parent=1 // pred_fallthru
      _
    // Predicated region
    $region18: #{tpu_custom_call.1} parent=1 // pred_check
      _
    $region19: #{tpu_custom_call.1} parent=1 // pred_check_branch
      %65 = sbr.rel (0) target = $region21
    $region20: #{tpu_custom_call.1} parent=1 // pred_region
      %67 = vsyncadd [#allocation5], 0
      %s69 = sshll.u32 [#allocation6], 4
      %s70 = int_to_ptr.vmem [resolvable:$true] %s69
      %s71 = sshll.u32 %s1, 4
      %s72 = int_to_ptr.hbm [resolvable:$true] %s71
      %74 = dma.vmem_to_hbm [thread:$0]  %s70, 16, %s72, [#allocation5]
    $region21: #{tpu_custom_call.1} parent=1 // pred_fallthru
      _
    // Predicated region
    $region22: #{tpu_custom_call.1} parent=1 // pred_check
      _
    $region23: #{tpu_custom_call.1} parent=1 // pred_check_branch
      %76 = sbr.rel (0) target = $region25
    $region24: #{tpu_custom_call.1} parent=1 // pred_region
      %78 = dma.done [#allocation5], 16
    $region25: #{tpu_custom_call.1} parent=1 // pred_fallthru
      _
    %79 = vsyncpa [#allocation4], 1
    %80 = vsyncpa [#allocation5], 1

</llo_original>
